<compile_context>
chip_gen: v6e
topology: v6e:2x2x1
jax: 0.10.0
libtpu: 0.0.40
codegen_flags: <defaults>
</compile_context>

<pallas_src>
import jax
import jax.numpy as jnp
from jax.experimental import pallas as pl
from jax.experimental.pallas import tpu as pltpu

# ----------------------------- model hyper-params ---------------------------
VOCAB_SIZE = 50
EMBED_DIM = 32          # embedding_dim
NUM_FILTERS = 16        # num_filters
FILTER_SIZE = 3         # filter_size
FC_DIM = 32             # fc_dim
NUM_BLOCKS = 2
OUTPUT_DIM = 1
SEQ_LEN = 16
BATCH = 2
BN_EPS = 1e-5

# derived static lengths of the two CNN blocks (per example)
L1 = SEQ_LEN - FILTER_SIZE + 1          # 14  conv1 "valid" output length
P1 = L1 // 2                            # 7   after MaxPool1d(2)
L2 = P1 - FILTER_SIZE + 1               # 5   conv2 output length
P2 = L2 // 2                            # 2   after MaxPool1d(2)
FLAT = NUM_FILTERS * P2                 # 32  flattened feature size

# flattened-batch lengths used by the fused kernel
BL = BATCH * SEQ_LEN                    # 32  rows of the flattened embedding
R1 = BL - FILTER_SIZE + 1               # 30  shifted conv-1 rows (incl. junk)
N1 = (R1 // 2) * 2                      # 30  rows entering pool 1
Q1 = N1 // 2                            # 15  pooled-1 rows (incl. junk)
STRIDE1 = SEQ_LEN // 2                  # 8   per-batch row stride in pooled-1
R2 = Q1 - FILTER_SIZE + 1               # 13  shifted conv-2 rows (incl. junk)
N2 = (R2 // 2) * 2                      # 12  rows entering pool 2
Q2 = N2 // 2                            # 6   pooled-2 rows (incl. junk)
STRIDE2 = STRIDE1 // 2                  # 4   per-batch row stride in pooled-2

# packed-weight layouts (wrapper packs, kernel slices statically)
PACK16_W1 = 0                                   # (FILTER_SIZE*EMBED_DIM, 16)
PACK16_W2 = PACK16_W1 + FILTER_SIZE * EMBED_DIM
PACK16_T1 = PACK16_W2 + FILTER_SIZE * NUM_FILTERS
PACK16_T2 = PACK16_T1 + 1
PACK16_ROWS = PACK16_T2 + 1                     # 146

PACK32_LANES = 32
assert EMBED_DIM == PACK32_LANES and FC_DIM == PACK32_LANES and FLAT == PACK32_LANES
PACK32_EMB = 0                                  # (VOCAB_SIZE, 32)
PACK32_WFC = PACK32_EMB + VOCAB_SIZE            # (FLAT, FC_DIM)
PACK32_BFC = PACK32_WFC + FLAT                  # (1, FC_DIM)
PACK32_WOUT = PACK32_BFC + 1                    # (FC_DIM, 32) col 0 real
PACK32_BOUT = PACK32_WOUT + FC_DIM              # (1, 32)      col 0 real
PACK32_ROWS = PACK32_BOUT + 1                   # 116


# --------------------------------- kernel -----------------------------------
def cnn_text_kernel(ids_ref, p16_ref, p32_ref, out_ref):
    """Single invocation: full batch, embedding -> 2 CNN blocks -> fc -> head."""
    # ---- unpack weights (static slices of the two packed operands) ----
    w1 = p16_ref[PACK16_W1:PACK16_W1 + FILTER_SIZE * EMBED_DIM, :]    # (96, 16)
    w2 = p16_ref[PACK16_W2:PACK16_W2 + FILTER_SIZE * NUM_FILTERS, :]  # (48, 16)
    t1 = p16_ref[PACK16_T1:PACK16_T1 + 1, :]                          # (1, 16)
    t2 = p16_ref[PACK16_T2:PACK16_T2 + 1, :]                          # (1, 16)

    emb = p32_ref[PACK32_EMB:PACK32_EMB + VOCAB_SIZE, :]              # (50, 32)
    wfc = p32_ref[PACK32_WFC:PACK32_WFC + FLAT, :]                    # (32, 32)
    bfc = p32_ref[PACK32_BFC:PACK32_BFC + 1, :]                       # (1, 32)
    wout = p32_ref[PACK32_WOUT:PACK32_WOUT + FC_DIM, :]               # (32, 32) col0 real
    bout = p32_ref[PACK32_BOUT:PACK32_BOUT + 1, :]                    # (1, 32)  col0 real

    # ---- fused embedding lookup: exact one-hot matmul on the MXU ----
    ids = ids_ref[...]                                                # (BL, 1) int32
    vocab_iota = jax.lax.broadcasted_iota(jnp.int32, (BL, VOCAB_SIZE), 1)
    onehot = (ids == vocab_iota).astype(jnp.float32)                  # (BL, 50)
    x = jnp.dot(onehot, emb, preferred_element_type=jnp.float32)      # (BL, 32)

    # ---- block 1: im2col conv (single matmul) + shift + ReLU + MaxPool(2) ----
    # Shifted windows over the flattened batch; windows crossing a batch
    # boundary produce junk rows that are never consumed downstream.
    xu1 = jnp.concatenate([x[t:t + R1, :] for t in range(FILTER_SIZE)],
                          axis=1)                                     # (30, 96)
    h = jnp.dot(xu1, w1, preferred_element_type=jnp.float32) + t1     # (30, 16)
    h = jnp.maximum(h, 0.0)                                           # BN folded
    pooled1 = jnp.max(h[:N1, :].reshape(Q1, 2, NUM_FILTERS), axis=1)  # (15, 16)

    # ---- block 2 ----
    xu2 = jnp.concatenate([pooled1[t:t + R2, :] for t in range(FILTER_SIZE)],
                          axis=1)                                     # (13, 48)
    g = jnp.dot(xu2, w2, preferred_element_type=jnp.float32) + t2     # (13, 16)
    g = jnp.maximum(g, 0.0)
    pooled2 = jnp.max(g[:N2, :].reshape(Q2, 2, NUM_FILTERS), axis=1)  # (6, 16)

    # ---- flatten (channel layout handled by the pre-permuted fc weight) ----
    # batch b's valid pooled-2 rows sit at b*STRIDE2 + l, l in [0, P2)
    flat = jnp.concatenate(
        [jnp.concatenate(
            [pooled2[b * STRIDE2 + l:b * STRIDE2 + l + 1, :] for l in range(P2)],
            axis=1)
         for b in range(BATCH)],
        axis=0)                                                       # (B, FLAT)

    # ---- fc + output head: two dense matmuls over the whole batch ----
    fc = jnp.dot(flat, wfc, preferred_element_type=jnp.float32) + bfc   # (B, 32)
    out = jnp.dot(fc, wout, preferred_element_type=jnp.float32) + bout  # (B, 32)
    out_ref[...] = out[:, 0:OUTPUT_DIM]                                  # (B, 1)


# --------------------------------- wrapper ----------------------------------
def _fold_bn_into_conv(conv_w, conv_b, bn):
    """Fold eval-mode BatchNorm (running stats) and conv bias into (w*scale, shift)."""
    gamma, beta, mean, var = bn
    scale = gamma / jnp.sqrt(var + BN_EPS)               # (F,)
    shift = (conv_b - mean) * scale + beta               # (F,)
    return conv_w * scale[:, None, None], shift          # scale per out-channel


def _pack_weights(params):
    w1s, t1 = _fold_bn_into_conv(params["w1"], params["b1"], params["bn1"])
    w2s, t2 = _fold_bn_into_conv(params["w2"], params["b2"], params["bn2"])

    # torch conv weight (C_out, C_in, K) -> im2col weight (K*C_in, C_out)
    w1u = jnp.transpose(w1s, (2, 1, 0)).reshape(FILTER_SIZE * EMBED_DIM, NUM_FILTERS)
    w2u = jnp.transpose(w2s, (2, 1, 0)).reshape(FILTER_SIZE * NUM_FILTERS, NUM_FILTERS)
    pack16 = jnp.concatenate(
        [w1u, w2u, t1.reshape(1, NUM_FILTERS), t2.reshape(1, NUM_FILTERS)], axis=0)

    # fc weight: torch (FC_DIM, FLAT) with channel-major flat index f*P2 + l
    # -> kernel (P2*F, FC_DIM) with row index l*F + f (matches in-kernel flatten).
    wfc = jnp.transpose(params["w_fc"].reshape(FC_DIM, NUM_FILTERS, P2),
                        (2, 1, 0)).reshape(FLAT, FC_DIM)
    bfc = params["b_fc"].reshape(1, FC_DIM)
    wout_pad = jnp.zeros((FC_DIM, PACK32_LANES), jnp.float32)
    wout_pad = wout_pad.at[:, :OUTPUT_DIM].set(jnp.transpose(params["w_out"]))
    bout_pad = jnp.zeros((1, PACK32_LANES), jnp.float32)
    bout_pad = bout_pad.at[:, :OUTPUT_DIM].set(params["b_out"].reshape(1, OUTPUT_DIM))

    pack32 = jnp.concatenate(
        [params["embedding"], wfc, bfc, wout_pad, bout_pad], axis=0)
    return pack16, pack32


def cnn_text_forward(token_ids, params):
    pack16, pack32 = _pack_weights(params)
    ids = token_ids.reshape(BL, 1).astype(jnp.int32)

    out = pl.pallas_call(
        cnn_text_kernel,
        out_shape=jax.ShapeDtypeStruct((BATCH, OUTPUT_DIM), jnp.float32),
        grid=(1,),
        in_specs=[
            pl.BlockSpec((BL, 1), lambda i: (0, 0)),
            pl.BlockSpec((PACK16_ROWS, NUM_FILTERS), lambda i: (0, 0)),
            pl.BlockSpec((PACK32_ROWS, PACK32_LANES), lambda i: (0, 0)),
        ],
        out_specs=pl.BlockSpec((BATCH, OUTPUT_DIM), lambda i: (0, 0)),
        compiler_params=pltpu.CompilerParams(dimension_semantics=("arbitrary",)),
    )(ids, pack16, pack32)

    return out[:, 0]    # .squeeze(1) -> (B,)


# ------------------------------ pure-JAX reference --------------------------
def reference_forward(token_ids, params):
    x = jnp.take(params["embedding"], token_ids, axis=0)    # (B, L, E)
    x = jnp.transpose(x, (0, 2, 1))                         # (B, E, L)  NCL

    def block(x, w, b, bn):
        gamma, beta, mean, var = bn
        y = jax.lax.conv_general_dilated(
            x, w, window_strides=(1,), padding="VALID",
            dimension_numbers=("NCH", "OIH", "NCH")) + b[None, :, None]
        y = (y - mean[None, :, None]) / jnp.sqrt(var[None, :, None] + BN_EPS)
        y = y * gamma[None, :, None] + beta[None, :, None]
        y = jnp.maximum(y, 0.0)
        lo = y.shape[2] // 2
        y = jnp.max(y[:, :, :2 * lo].reshape(y.shape[0], y.shape[1], lo, 2), axis=3)
        return y

    x = block(x, params["w1"], params["b1"], params["bn1"])
    x = block(x, params["w2"], params["b2"], params["bn2"])
    flat = x.reshape(x.shape[0], -1)                        # channel-major flatten
    fc = flat @ params["w_fc"].T + params["b_fc"]
    out = fc @ params["w_out"].T + params["b_out"]
    return out[:, 0]


# ------------------------------ deterministic init --------------------------
def init_params(key):
    ks = jax.random.split(key, 20)
    f32 = jnp.float32

    def nrm(k, shape, scale):
        return scale * jax.random.normal(k, shape, dtype=f32)

    def uni(k, shape):
        return jax.random.uniform(k, shape, f32, 0.5, 1.5)

    return {
        "embedding": nrm(ks[0], (VOCAB_SIZE, EMBED_DIM), 0.5),
        "w1": nrm(ks[1], (NUM_FILTERS, EMBED_DIM, FILTER_SIZE), 0.15),
        "b1": nrm(ks[2], (NUM_FILTERS,), 0.05),
        "bn1": (uni(ks[3], (NUM_FILTERS,)), nrm(ks[4], (NUM_FILTERS,), 0.05),
                nrm(ks[5], (NUM_FILTERS,), 0.05), uni(ks[6], (NUM_FILTERS,))),
        "w2": nrm(ks[7], (NUM_FILTERS, NUM_FILTERS, FILTER_SIZE), 0.15),
        "b2": nrm(ks[8], (NUM_FILTERS,), 0.05),
        "bn2": (uni(ks[9], (NUM_FILTERS,)), nrm(ks[10], (NUM_FILTERS,), 0.05),
                nrm(ks[11], (NUM_FILTERS,), 0.05), uni(ks[12], (NUM_FILTERS,))),
        "w_fc": nrm(ks[13], (FC_DIM, FLAT), 0.15),
        "b_fc": nrm(ks[14], (FC_DIM,), 0.05),
        "w_out": nrm(ks[15], (OUTPUT_DIM, FC_DIM), 0.15),
        "b_out": nrm(ks[16], (OUTPUT_DIM,), 0.05),
    }


if __name__ == "__main__":
    key = jax.random.PRNGKey(0)
    pkey, dkey = jax.random.split(key)
    params = init_params(pkey)
    token_ids = jax.random.randint(dkey, (BATCH, SEQ_LEN), 0, VOCAB_SIZE)

    fwd = jax.jit(cnn_text_forward)
    out = fwd(token_ids, params)
    out = jax.block_until_ready(out)

    ref = reference_forward(token_ids, params)
    assert out.shape == (BATCH,), out.shape
    if not jnp.allclose(out, ref, atol=2e-3, rtol=1e-2):
        raise AssertionError(f"mismatch: kernel={out} ref={ref}")
    print("KERNEL_OK")
</pallas_src>

<mosaic_0001>
module attributes {stable_mosaic.version = 11 : i64} {
  func.func @cnn_text_kernel(%arg0: i32, %arg1: memref<32x1xi32, #tpu.memory_space<vmem>>, %arg2: memref<146x16xf32, #tpu.memory_space<vmem>>, %arg3: memref<116x32xf32, #tpu.memory_space<vmem>>, %arg4: memref<2x1xf32, #tpu.memory_space<vmem>>) attributes {dimension_semantics = [#tpu.dimension_semantics<arbitrary>], iteration_bounds = array<i64: 1>, scalar_prefetch = 0 : i64, scratch_operands = 0 : i64, tpu.core_type = #tpu.core_type<tc>, window_params = [{pipeline_mode = #tpu.pipeline_mode<synchronous>, transform_indices = @transform_0, window_bounds = array<i64: 32, 1>}, {pipeline_mode = #tpu.pipeline_mode<synchronous>, transform_indices = @transform_1, window_bounds = array<i64: 146, 16>}, {pipeline_mode = #tpu.pipeline_mode<synchronous>, transform_indices = @transform_2, window_bounds = array<i64: 116, 32>}, {pipeline_mode = #tpu.pipeline_mode<synchronous>, transform_indices = @transform_3, window_bounds = array<i64: 2, 1>}]} {
    %c0 = arith.constant 0 : index
    %c0_0 = arith.constant 0 : index
    %0 = vector.load %arg2[%c0, %c0_0] : memref<146x16xf32, #tpu.memory_space<vmem>>, vector<96x16xf32>
    %c96 = arith.constant 96 : index
    %c0_1 = arith.constant 0 : index
    %1 = vector.load %arg2[%c96, %c0_1] : memref<146x16xf32, #tpu.memory_space<vmem>>, vector<48x16xf32>
    %c144 = arith.constant 144 : index
    %c0_2 = arith.constant 0 : index
    %2 = vector.load %arg2[%c144, %c0_2] : memref<146x16xf32, #tpu.memory_space<vmem>>, vector<1x16xf32>
    %c145 = arith.constant 145 : index
    %c0_3 = arith.constant 0 : index
    %3 = vector.load %arg2[%c145, %c0_3] : memref<146x16xf32, #tpu.memory_space<vmem>>, vector<1x16xf32>
    %c0_4 = arith.constant 0 : index
    %c0_5 = arith.constant 0 : index
    %4 = vector.load %arg3[%c0_4, %c0_5] : memref<116x32xf32, #tpu.memory_space<vmem>>, vector<50x32xf32>
    %c50 = arith.constant 50 : index
    %c0_6 = arith.constant 0 : index
    %5 = vector.load %arg3[%c50, %c0_6] : memref<116x32xf32, #tpu.memory_space<vmem>>, vector<32x32xf32>
    %c82 = arith.constant 82 : index
    %c0_7 = arith.constant 0 : index
    %6 = vector.load %arg3[%c82, %c0_7] : memref<116x32xf32, #tpu.memory_space<vmem>>, vector<1x32xf32>
    %c83 = arith.constant 83 : index
    %c0_8 = arith.constant 0 : index
    %7 = vector.load %arg3[%c83, %c0_8] : memref<116x32xf32, #tpu.memory_space<vmem>>, vector<32x32xf32>
    %c115 = arith.constant 115 : index
    %c0_9 = arith.constant 0 : index
    %8 = vector.load %arg3[%c115, %c0_9] : memref<116x32xf32, #tpu.memory_space<vmem>>, vector<1x32xf32>
    %c0_10 = arith.constant 0 : index
    %c0_11 = arith.constant 0 : index
    %9 = vector.load %arg1[%c0_10, %c0_11] : memref<32x1xi32, #tpu.memory_space<vmem>>, vector<32x1xi32>
    %10 = tpu.iota {dimensions = array<i32: 1>} : vector<32x50xi32>
    %11 = vector.broadcast %9 : vector<32x1xi32> to vector<32x50xi32>
    %12 = arith.cmpi eq, %11, %10 : vector<32x50xi32>
    %13 = arith.extui %12 : vector<32x50xi1> to vector<32x50xi32>
    %14 = arith.sitofp %13 : vector<32x50xi32> to vector<32x50xf32>
    %cst = arith.constant dense<0.000000e+00> : vector<32x32xf32>
    %15 = tpu.matmul %14, %4, %cst {dimension_numbers = #tpu.dot_dimension_numbers<[1], [0], [0], [1], [0, 0, 1, 1], [], []>} : vector<32x50xf32>, vector<50x32xf32>, vector<32x32xf32> -> vector<32x32xf32>
    %16 = vector.extract_strided_slice %15 {offsets = [0, 0], sizes = [30, 32], strides = [1, 1]} : vector<32x32xf32> to vector<30x32xf32>
    %17 = vector.extract_strided_slice %15 {offsets = [1, 0], sizes = [30, 32], strides = [1, 1]} : vector<32x32xf32> to vector<30x32xf32>
    %18 = vector.extract_strided_slice %15 {offsets = [2, 0], sizes = [30, 32], strides = [1, 1]} : vector<32x32xf32> to vector<30x32xf32>
    %19 = tpu.concatenate %16, %17, %18 in 1 : vector<30x32xf32>, vector<30x32xf32>, vector<30x32xf32> -> vector<30x96xf32>
    %cst_12 = arith.constant dense<0.000000e+00> : vector<30x16xf32>
    %20 = tpu.matmul %19, %0, %cst_12 {dimension_numbers = #tpu.dot_dimension_numbers<[1], [0], [0], [1], [0, 0, 1, 1], [], []>} : vector<30x96xf32>, vector<96x16xf32>, vector<30x16xf32> -> vector<30x16xf32>
    %21 = vector.broadcast %2 : vector<1x16xf32> to vector<30x16xf32>
    %22 = arith.addf %20, %21 : vector<30x16xf32>
    %cst_13 = arith.constant 0.000000e+00 : f32
    %23 = vector.broadcast %cst_13 : f32 to vector<30x16xf32>
    %24 = arith.maximumf %22, %23 : vector<30x16xf32>
    %25 = vector.shape_cast %24 : vector<30x16xf32> to vector<15x2x16xf32>
    %cst_14 = arith.constant dense<0xFF800000> : vector<15x16xf32>
    %26 = vector.multi_reduction <maximumf>, %25, %cst_14 [1] : vector<15x2x16xf32> to vector<15x16xf32>
    %27 = vector.extract_strided_slice %26 {offsets = [0, 0], sizes = [13, 16], strides = [1, 1]} : vector<15x16xf32> to vector<13x16xf32>
    %28 = vector.extract_strided_slice %26 {offsets = [1, 0], sizes = [13, 16], strides = [1, 1]} : vector<15x16xf32> to vector<13x16xf32>
    %29 = vector.extract_strided_slice %26 {offsets = [2, 0], sizes = [13, 16], strides = [1, 1]} : vector<15x16xf32> to vector<13x16xf32>
    %30 = tpu.concatenate %27, %28, %29 in 1 : vector<13x16xf32>, vector<13x16xf32>, vector<13x16xf32> -> vector<13x48xf32>
    %cst_15 = arith.constant dense<0.000000e+00> : vector<13x16xf32>
    %31 = tpu.matmul %30, %1, %cst_15 {dimension_numbers = #tpu.dot_dimension_numbers<[1], [0], [0], [1], [0, 0, 1, 1], [], []>} : vector<13x48xf32>, vector<48x16xf32>, vector<13x16xf32> -> vector<13x16xf32>
    %32 = vector.broadcast %3 : vector<1x16xf32> to vector<13x16xf32>
    %33 = arith.addf %31, %32 : vector<13x16xf32>
    %cst_16 = arith.constant 0.000000e+00 : f32
    %34 = vector.broadcast %cst_16 : f32 to vector<13x16xf32>
    %35 = arith.maximumf %33, %34 : vector<13x16xf32>
    %36 = vector.extract_strided_slice %35 {offsets = [0, 0], sizes = [12, 16], strides = [1, 1]} : vector<13x16xf32> to vector<12x16xf32>
    %37 = vector.shape_cast %36 : vector<12x16xf32> to vector<6x2x16xf32>
    %cst_17 = arith.constant dense<0xFF800000> : vector<6x16xf32>
    %38 = vector.multi_reduction <maximumf>, %37, %cst_17 [1] : vector<6x2x16xf32> to vector<6x16xf32>
    %39 = vector.extract_strided_slice %38 {offsets = [0, 0], sizes = [1, 16], strides = [1, 1]} : vector<6x16xf32> to vector<1x16xf32>
    %40 = vector.extract_strided_slice %38 {offsets = [1, 0], sizes = [1, 16], strides = [1, 1]} : vector<6x16xf32> to vector<1x16xf32>
    %41 = tpu.concatenate %39, %40 in 1 : vector<1x16xf32>, vector<1x16xf32> -> vector<1x32xf32>
    %42 = vector.extract_strided_slice %38 {offsets = [4, 0], sizes = [1, 16], strides = [1, 1]} : vector<6x16xf32> to vector<1x16xf32>
    %43 = vector.extract_strided_slice %38 {offsets = [5, 0], sizes = [1, 16], strides = [1, 1]} : vector<6x16xf32> to vector<1x16xf32>
    %44 = tpu.concatenate %42, %43 in 1 : vector<1x16xf32>, vector<1x16xf32> -> vector<1x32xf32>
    %45 = tpu.concatenate %41, %44 in 0 : vector<1x32xf32>, vector<1x32xf32> -> vector<2x32xf32>
    %cst_18 = arith.constant dense<0.000000e+00> : vector<2x32xf32>
    %46 = tpu.matmul %45, %5, %cst_18 {dimension_numbers = #tpu.dot_dimension_numbers<[1], [0], [0], [1], [0, 0, 1, 1], [], []>} : vector<2x32xf32>, vector<32x32xf32>, vector<2x32xf32> -> vector<2x32xf32>
    %47 = vector.broadcast %6 : vector<1x32xf32> to vector<2x32xf32>
    %48 = arith.addf %46, %47 : vector<2x32xf32>
    %cst_19 = arith.constant dense<0.000000e+00> : vector<2x32xf32>
    %49 = tpu.matmul %48, %7, %cst_19 {dimension_numbers = #tpu.dot_dimension_numbers<[1], [0], [0], [1], [0, 0, 1, 1], [], []>} : vector<2x32xf32>, vector<32x32xf32>, vector<2x32xf32> -> vector<2x32xf32>
    %50 = vector.broadcast %8 : vector<1x32xf32> to vector<2x32xf32>
    %51 = arith.addf %49, %50 : vector<2x32xf32>
    %52 = vector.extract_strided_slice %51 {offsets = [0, 0], sizes = [2, 1], strides = [1, 1]} : vector<2x32xf32> to vector<2x1xf32>
    %c0_20 = arith.constant 0 : index
    %c0_21 = arith.constant 0 : index
    %53 = vector.load %arg4[%c0_20, %c0_21] : memref<2x1xf32, #tpu.memory_space<vmem>>, vector<2x1xf32>
    tpu.vector_store %arg4[%c0_20, %c0_21], %52 {strides = array<i32>} : memref<2x1xf32, #tpu.memory_space<vmem>>, vector<2x1xf32>,
    return
  }
  func.func @transform_0(%arg0: i32) -> (i32, i32) {
    %c0_i32 = arith.constant 0 : i32
    %c0_i32_0 = arith.constant 0 : i32
    %c0_i32_1 = arith.constant 0 : i32
    return %c0_i32, %c0_i32_0 : i32, i32
  }
  func.func @transform_1(%arg0: i32) -> (i32, i32) {
    %c0_i32 = arith.constant 0 : i32
    %c0_i32_0 = arith.constant 0 : i32
    %c0_i32_1 = arith.constant 0 : i32
    return %c0_i32, %c0_i32_0 : i32, i32
  }
  func.func @transform_2(%arg0: i32) -> (i32, i32) {
    %c0_i32 = arith.constant 0 : i32
    %c0_i32_0 = arith.constant 0 : i32
    %c0_i32_1 = arith.constant 0 : i32
    return %c0_i32, %c0_i32_0 : i32, i32
  }
  func.func @transform_3(%arg0: i32) -> (i32, i32) {
    %c0_i32 = arith.constant 0 : i32
    %c0_i32_0 = arith.constant 0 : i32
    %c0_i32_1 = arith.constant 0 : i32
    return %c0_i32, %c0_i32_0 : i32, i32
  }
}

</mosaic_0001>

<llo_original>
// kernel: cnn_text_forward.1
$region0: #{cnn_text_forward.1}
  #allocation0 [shape = 'u32[]', space=smem, size = 0x4, offset = 0x4, fixed_abs, tag = 'smem constant byte address 0x4 - core index']
  #allocation1 [shape = 'u32[144,128]{1,0:T(1,128)}', space=vmem, size = 0x12000, scoped, tag = 'internal scratch']
  %s0 = inlined_call_operand.vmem [shape: s32[32,1], index: 0, kind: input, shape index: {}]
  %s1 = inlined_call_operand.vmem [shape: f32[146,16], index: 1, kind: input, shape index: {}]
  %s2 = inlined_call_operand.vmem [shape: f32[116,32], index: 2, kind: input, shape index: {}]
  %s3 = inlined_call_operand.vmem [shape: f32[2,1], index: 3, kind: output, shape index: {}]
  %s4 = sld [smem:[#allocation0]]
  $region22: #{cnn_text_forward.1} parent=0
    _
  %s6 = ssub.s32 1, %s4
  %s7 = scalar_select 0, %s6, %s4
  // Predicated region
  $region2: #{cnn_text_forward.1} parent=0 // pred_check
    _
  $region3: #{cnn_text_forward.1} parent=0 // pred_check_branch
    %9 = sbr.rel (0) target = $region5
  $region4: #{cnn_text_forward.1} parent=0 // pred_region
    _
  $region5: #{cnn_text_forward.1} parent=0 // pred_fallthru
    _
  // Predicated region
  $region6: #{cnn_text_forward.1} parent=0 // pred_check
    _
  $region7: #{cnn_text_forward.1} parent=0 // pred_check_branch
    %11 = sbr.rel (0) target = $region9
  $region8: #{cnn_text_forward.1} parent=0 // pred_region
    _
  $region9: #{cnn_text_forward.1} parent=0 // pred_fallthru
    _
  // Predicated region
  $region10: #{cnn_text_forward.1} parent=0 // pred_check
    _
  $region11: #{cnn_text_forward.1} parent=0 // pred_check_branch
    %13 = sbr.rel (0) target = $region13
  $region12: #{cnn_text_forward.1} parent=0 // pred_region
    _
  $region13: #{cnn_text_forward.1} parent=0 // pred_fallthru
    _
  %v14 = vld [vmem:[%s1] sm:$0xff]
  %v15 = vld [vmem:[%s1 + $0x8] sm:$0xff]
  %v16 = vld [vmem:[%s1 + $0x10] sm:$0xff]
  %v17 = vld [vmem:[%s1 + $0x18] sm:$0xff]
  %v18 = vld [vmem:[%s1 + $0x20] sm:$0xff]
  %v19 = vld [vmem:[%s1 + $0x28] sm:$0xff]
  %v20 = vld [vmem:[%s1 + $0x30] sm:$0xff]
  %v21 = vld [vmem:[%s1 + $0x38] sm:$0xff]
  %v22 = vld [vmem:[%s1 + $0x40] sm:$0xff]
  %v23 = vld [vmem:[%s1 + $0x48] sm:$0xff]
  %v24 = vld [vmem:[%s1 + $0x50] sm:$0xff]
  %v25 = vld [vmem:[%s1 + $0x58] sm:$0xff]
  %v26 = vld [vmem:[%s1 + $0x60] sm:$0xff]
  %v27 = vld [vmem:[%s1 + $0x68] sm:$0xff]
  %v28 = vld [vmem:[%s1 + $0x70] sm:$0xff]
  %v29 = vld [vmem:[%s1 + $0x78] sm:$0xff]
  %v30 = vld [vmem:[%s1 + $0x80] sm:$0xff]
  %v31 = vld [vmem:[%s1 + $0x88] sm:$0xff]
  %v32 = vld [vmem:[%s1 + $0x90] sm:$0x1]
  %v33 = vld [vmem:[%s1 + $0x91] sm:$0x1]
  %v34 = vld [vmem:[%s2] sm:$0xff]
  %v35 = vld [vmem:[%s2 + $0x8] sm:$0xff]
  %v36 = vld [vmem:[%s2 + $0x10] sm:$0xff]
  %v37 = vld [vmem:[%s2 + $0x18] sm:$0xff]
  %v38 = vld [vmem:[%s2 + $0x20] sm:$0xff]
  %v39 = vld [vmem:[%s2 + $0x28] sm:$0xff]
  %v40 = vld [vmem:[%s2 + $0x30] sm:$0x3]
  %v41 = vld [vmem:[%s2 + $0x32] sm:$0xff]
  %v42 = vld [vmem:[%s2 + $0x3a] sm:$0xff]
  %v43 = vld [vmem:[%s2 + $0x42] sm:$0xff]
  %v44 = vld [vmem:[%s2 + $0x4a] sm:$0xff]
  %v45 = vld [vmem:[%s2 + $0x52] sm:$0x1]
  %v46 = vld [vmem:[%s2 + $0x53] sm:$0xff]
  %v47 = vld [vmem:[%s2 + $0x5b] sm:$0xff]
  %v48 = vld [vmem:[%s2 + $0x63] sm:$0xff]
  %v49 = vld [vmem:[%s2 + $0x6b] sm:$0xff]
  %v50 = vld [vmem:[%s2 + $0x73] sm:$0x1]
  %v51 = vld [vmem:[%s0] sm:$0xff]
  %v52 = vld [vmem:[%s0 + $0x8] sm:$0xff]
  %v53 = vld [vmem:[%s0 + $0x10] sm:$0xff]
  %v54 = vld [vmem:[%s0 + $0x18] sm:$0xff]
  %v55 = vlaneseq
  %v56 = vand.u32 %v55, 127
  %57 = vset.pattern.permute.xlu0 0
  %58 = vperm.xlu0 %57, %v51
  %v59 = vpop.permute.xlu0 %58
  %60 = vset.pattern.permute.xlu0 0
  %61 = vperm.xlu0 %60, %v52
  %v62 = vpop.permute.xlu0 %61
  %63 = vset.pattern.permute.xlu0 0
  %64 = vperm.xlu0 %63, %v53
  %v65 = vpop.permute.xlu0 %64
  %66 = vset.pattern.permute.xlu0 0
  %67 = vperm.xlu0 %66, %v54
  %v68 = vpop.permute.xlu0 %67
  %vm69 = vcmp.eq.s32.totalorder %v59, %v56
  %vm70 = vcmp.eq.s32.totalorder %v62, %v56
  %vm71 = vcmp.eq.s32.totalorder %v65, %v56
  %vm72 = vcmp.eq.s32.totalorder %v68, %v56
  %v73 = vsel %vm69, 1, 0
  %v74 = vsel %vm70, 1, 0
  %v75 = vsel %vm71, 1, 0
  %v76 = vsel %vm72, 1, 0
  %v77 = vcvt.s32.f32 %v73
  %v78 = vcvt.s32.f32 %v74
  %v79 = vcvt.s32.f32 %v75
  %v80 = vcvt.s32.f32 %v76
  %vm81 = vcmask 408576
  %v83 = vsel %vm81, %v77, 0
  %v86 = vsel %vm81, %v78, 0
  %v89 = vsel %vm81, %v79, 0
  %v92 = vsel %vm81, %v80, 0
  %vm94 = vcmask 1041408
  %v96 = vsel %vm94, %v40, 0
  %98 = vmatprep.subr.mxu0 0.0
  %99 = vmatpush1.msra.mxu0 0.0
  %100 = vmatprep.subr.mxu0 0.0
  %101 = vmatpush1.msra.mxu0 0.0
  %102 = vmatprep.subr.mxu0 0.0
  %103 = vmatpush1.msra.mxu0 0.0
  %104 = vmatprep.subr.mxu0 0.0
  %105 = vmatpush1.msra.mxu0 0.0
  %106 = vmatprep.subr.mxu0 0.0
  %107 = vmatpush1.msra.mxu0 0.0
  %108 = vmatprep.subr.mxu0 0.0
  %109 = vmatpush1.msra.mxu0 0.0
  %110 = vmatprep.subr.mxu0 0.0
  %111 = vmatpush1.msra.mxu0 0.0
  %112 = vmatprep.subr.mxu0 0.0
  %113 = vmatpush1.msra.mxu0 0.0
  %114 = vmatprep.subr.mxu0 0.0
  %115 = vmatpush1.msra.mxu0 0.0
  %116 = vmatprep.subr.mxu0 0.0
  %117 = vmatpush1.msra.mxu0 %v96
  %118 = vmatprep.subr.mxu0 0.0
  %119 = vmatpush1.msra.mxu0 %v39
  %120 = vmatprep.subr.mxu0 0.0
  %121 = vmatpush1.msra.mxu0 %v38
  %122 = vmatprep.subr.mxu0 0.0
  %123 = vmatpush1.msra.mxu0 %v37
  %124 = vmatprep.subr.mxu0 0.0
  %125 = vmatpush1.msra.mxu0 %v36
  %126 = vmatprep.subr.mxu0 0.0
  %127 = vmatpush1.msra.mxu0 %v35
  %128 = vmatprep.subr.mxu0 0.0
  %129 = vmatpush1.msra.mxu0 %v34
  %130 = vmatprep.subr.mxu0 0.0
  %131 = vmatpush2.msra.mxu0 0.0
  %132 = vmatprep.subr.mxu0 0.0
  %133 = vmatpush2.msra.mxu0 0.0
  %134 = vmatprep.subr.mxu0 0.0
  %135 = vmatpush2.msra.mxu0 0.0
  %136 = vmatprep.subr.mxu0 0.0
  %137 = vmatpush2.msra.mxu0 0.0
  %138 = vmatprep.subr.mxu0 0.0
  %139 = vmatpush2.msra.mxu0 0.0
  %140 = vmatprep.subr.mxu0 0.0
  %141 = vmatpush2.msra.mxu0 0.0
  %142 = vmatprep.subr.mxu0 0.0
  %143 = vmatpush2.msra.mxu0 0.0
  %144 = vmatprep.subr.mxu0 0.0
  %145 = vmatpush2.msra.mxu0 0.0
  %146 = vmatprep.subr.mxu0 0.0
  %147 = vmatpush2.msra.mxu0 0.0
  %148 = vmatprep.subr.mxu0 0.0
  %149 = vmatpush2.msra.mxu0 0.0
  %150 = vmatprep.subr.mxu0 0.0
  %151 = vmatpush2.msra.mxu0 0.0
  %152 = vmatprep.subr.mxu0 0.0
  %153 = vmatpush2.msra.mxu0 0.0
  %154 = vmatprep.subr.mxu0 0.0
  %155 = vmatpush2.msra.mxu0 0.0
  %156 = vmatprep.subr.mxu0 0.0
  %157 = vmatpush2.msra.mxu0 0.0
  %158 = vmatprep.subr.mxu0 0.0
  %159 = vmatpush2.msra.mxu0 0.0
  %160 = vmatprep.subr.mxu0 0.0
  %161 = vmatpush2.msra.mxu0 0.0
  %162 = vmatprep.mubr.f32.mxu0 0.0
  %163 = vmatmul.mubr.f32.gmra.mxu0 %v83
  %v164 = vpop.f32.mrf.mxu0
  %v165 = vadd.f32 0.0, %v164
  %v166 = vpop.f32.mrf.mxu0
  %167 = vmatprep.mubr.f32.mxu0 0.0
  %168 = vmatmul.mubr.f32.gmra.mxu0 %v86
  %v169 = vpop.f32.mrf.mxu0
  %v170 = vadd.f32 0.0, %v169
  %v171 = vpop.f32.mrf.mxu0
  %172 = vmatprep.mubr.f32.mxu0 0.0
  %173 = vmatmul.mubr.f32.gmra.mxu0 %v89
  %v174 = vpop.f32.mrf.mxu0
  %v175 = vadd.f32 0.0, %v174
  %v176 = vpop.f32.mrf.mxu0
  %177 = vmatprep.mubr.f32.mxu0 0.0
  %178 = vmatmul.mubr.f32.gmra.mxu0 %v92
  %v179 = vpop.f32.mrf.mxu0
  %v180 = vadd.f32 0.0, %v179
  %v181 = vpop.f32.mrf.mxu0
  %182 = vdwg.mxu0
  %vm187 = vcmask 1046528
  %v188 = vrot.slane %v165, 1
  %v189 = vrot.slane %v170, 1
  %v190 = vsel %vm187, %v188, %v189
  %v191 = vrot.slane %v175, 1
  %v192 = vsel %vm187, %v189, %v191
  %v193 = vrot.slane %v180, 1
  %v194 = vsel %vm187, %v191, %v193
  %195 = vrot.lane.b32.xlu0 %v190, 32
  %v196 = vpop.permute.xlu0 %195
  %197 = vrot.lane.b32.xlu0 %v192, 32
  %v198 = vpop.permute.xlu0 %197
  %199 = vrot.lane.b32.xlu0 %v194, 32
  %v200 = vpop.permute.xlu0 %199
  %201 = vrot.lane.b32.xlu0 %v193, 32
  %v202 = vpop.permute.xlu0 %201
  %vm207 = vcmask 1045504
  %v208 = vrot.slane %v165, 2
  %v209 = vrot.slane %v170, 2
  %v210 = vsel %vm207, %v208, %v209
  %v211 = vrot.slane %v175, 2
  %v212 = vsel %vm207, %v209, %v211
  %v213 = vrot.slane %v180, 2
  %v214 = vsel %vm207, %v211, %v213
  %215 = vrot.lane.b32.xlu0 %v210, 64
  %v216 = vpop.permute.xlu0 %215
  %217 = vrot.lane.b32.xlu0 %v212, 64
  %v218 = vpop.permute.xlu0 %217
  %219 = vrot.lane.b32.xlu0 %v214, 64
  %v220 = vpop.permute.xlu0 %219
  %221 = vrot.lane.b32.xlu0 %v213, 64
  %v222 = vpop.permute.xlu0 %221
  %vm227 = vcmask 261120
  %v228 = vsel %vm227, %v165, %v196
  %v229 = vsel %vm227, %v170, %v198
  %v230 = vsel %vm227, %v175, %v200
  %v231 = vsel %vm227, %v180, %v202
  %vm232 = vcmask 523264
  %v233 = vsel %vm232, %v228, %v216
  %v234 = vsel %vm232, %v229, %v218
  %v235 = vsel %vm232, %v230, %v220
  %v236 = vsel %vm232, %v231, %v222
  %v237 = vlaneseq
  %v238 = vshrl.u32 %v237, 7
  %v239 = vsub.s32 0, %v238
  %v240 = vrot.slane %v32, %v239
  %vm241 = vcmask 785408
  %v243 = vsel %vm241, %v233, 0
  %v246 = vsel %vm241, %v234, 0
  %v249 = vsel %vm241, %v235, 0
  %v252 = vsel %vm241, %v236, 0
  %254 = vmatprep.subr.mxu0 0.0
  %255 = vmatpush1.msra.mxu0 0.0
  %256 = vmatprep.subr.mxu0 0.0
  %257 = vmatpush1.msra.mxu0 0.0
  %258 = vmatprep.subr.mxu0 0.0
  %259 = vmatpush1.msra.mxu0 0.0
  %260 = vmatprep.subr.mxu0 0.0
  %261 = vmatpush1.msra.mxu0 0.0
  %262 = vmatprep.subr.mxu0 0.0
  %263 = vmatpush1.msra.mxu0 %v25
  %264 = vmatprep.subr.mxu0 0.0
  %265 = vmatpush1.msra.mxu0 %v24
  %266 = vmatprep.subr.mxu0 0.0
  %267 = vmatpush1.msra.mxu0 %v23
  %268 = vmatprep.subr.mxu0 0.0
  %269 = vmatpush1.msra.mxu0 %v22
  %270 = vmatprep.subr.mxu0 0.0
  %271 = vmatpush1.msra.mxu0 %v21
  %272 = vmatprep.subr.mxu0 0.0
  %273 = vmatpush1.msra.mxu0 %v20
  %274 = vmatprep.subr.mxu0 0.0
  %275 = vmatpush1.msra.mxu0 %v19
  %276 = vmatprep.subr.mxu0 0.0
  %277 = vmatpush1.msra.mxu0 %v18
  %278 = vmatprep.subr.mxu0 0.0
  %279 = vmatpush1.msra.mxu0 %v17
  %280 = vmatprep.subr.mxu0 0.0
  %281 = vmatpush1.msra.mxu0 %v16
  %282 = vmatprep.subr.mxu0 0.0
  %283 = vmatpush1.msra.mxu0 %v15
  %284 = vmatprep.subr.mxu0 0.0
  %285 = vmatpush1.msra.mxu0 %v14
  %286 = vmatprep.subr.mxu0 0.0
  %287 = vmatpush2.msra.mxu0 0.0
  %288 = vmatprep.subr.mxu0 0.0
  %289 = vmatpush2.msra.mxu0 0.0
  %290 = vmatprep.subr.mxu0 0.0
  %291 = vmatpush2.msra.mxu0 0.0
  %292 = vmatprep.subr.mxu0 0.0
  %293 = vmatpush2.msra.mxu0 0.0
  %294 = vmatprep.subr.mxu0 0.0
  %295 = vmatpush2.msra.mxu0 0.0
  %296 = vmatprep.subr.mxu0 0.0
  %297 = vmatpush2.msra.mxu0 0.0
  %298 = vmatprep.subr.mxu0 0.0
  %299 = vmatpush2.msra.mxu0 0.0
  %300 = vmatprep.subr.mxu0 0.0
  %301 = vmatpush2.msra.mxu0 0.0
  %302 = vmatprep.subr.mxu0 0.0
  %303 = vmatpush2.msra.mxu0 0.0
  %304 = vmatprep.subr.mxu0 0.0
  %305 = vmatpush2.msra.mxu0 0.0
  %306 = vmatprep.subr.mxu0 0.0
  %307 = vmatpush2.msra.mxu0 0.0
  %308 = vmatprep.subr.mxu0 0.0
  %309 = vmatpush2.msra.mxu0 0.0
  %310 = vmatprep.subr.mxu0 0.0
  %311 = vmatpush2.msra.mxu0 0.0
  %312 = vmatprep.subr.mxu0 0.0
  %313 = vmatpush2.msra.mxu0 0.0
  %314 = vmatprep.subr.mxu0 0.0
  %315 = vmatpush2.msra.mxu0 0.0
  %316 = vmatprep.subr.mxu0 0.0
  %317 = vmatpush2.msra.mxu0 0.0
  %318 = vmatprep.mubr.f32.mxu0 0.0
  %319 = vmatmul.mubr.f32.gmra.mxu0 %v243
  %v320 = vpop.f32.mrf.mxu0
  %v321 = vadd.f32 %v240, %v320
  %v322 = vpop.f32.mrf.mxu0
  %323 = vmatprep.mubr.f32.mxu0 0.0
  %324 = vmatmul.mubr.f32.gmra.mxu0 %v246
  %v325 = vpop.f32.mrf.mxu0
  %v326 = vadd.f32 %v240, %v325
  %v327 = vpop.f32.mrf.mxu0
  %328 = vmatprep.mubr.f32.mxu0 0.0
  %329 = vmatmul.mubr.f32.gmra.mxu0 %v249
  %v330 = vpop.f32.mrf.mxu0
  %v331 = vadd.f32 %v240, %v330
  %v332 = vpop.f32.mrf.mxu0
  %333 = vmatprep.mubr.f32.mxu0 0.0
  %334 = vmatmul.mubr.f32.gmra.mxu0 %v252
  %v335 = vpop.f32.mrf.mxu0
  %v336 = vadd.f32 %v240, %v335
  %v337 = vpop.f32.mrf.mxu0
  %338 = vdwg.mxu0
  %v339 = vmax.f32 %v321, 0.0
  %v340 = vmax.f32 %v326, 0.0
  %v341 = vmax.f32 %v331, 0.0
  %v342 = vmax.f32 %v336, 0.0
  %v347 = vcombine.high %v339, %v339
  %v349 = vunpack.c.l.s4 1983009808
  %v350 = vunpack.c.0.s8 %v349
  %v351 = vlaneseq
  %v352 = vshrl.u32 %v351, 7
  %v353 = vsub.s32 %v350, %v352
  %v354 = vrot.slane %v339, %v353
  %v356 = vunpack.c.l.s4 1983009808
  %v357 = vunpack.c.0.s8 %v356
  %v358 = vlaneseq
  %v359 = vshrl.u32 %v358, 7
  %v360 = vsub.s32 %v357, %v359
  %v361 = vrot.slane %v347, %v360
  %v362 = vcombine.high %v354, %v354
  %v363 = vcombine.high %v361, %v361
  %v364 = vcombine.high %v340, %v340
  %v366 = vunpack.c.l.s4 1983009808
  %v367 = vunpack.c.0.s8 %v366
  %v368 = vlaneseq
  %v369 = vshrl.u32 %v368, 7
  %v370 = vsub.s32 %v367, %v369
  %v371 = vrot.slane %v340, %v370
  %v373 = vunpack.c.l.s4 1983009808
  %v374 = vunpack.c.0.s8 %v373
  %v375 = vlaneseq
  %v376 = vshrl.u32 %v375, 7
  %v377 = vsub.s32 %v374, %v376
  %v378 = vrot.slane %v364, %v377
  %v379 = vcombine.high %v371, %v371
  %v380 = vcombine.high %v378, %v378
  %v381 = vcombine.high %v341, %v341
  %v383 = vunpack.c.l.s4 1983009808
  %v384 = vunpack.c.0.s8 %v383
  %v385 = vlaneseq
  %v386 = vshrl.u32 %v385, 7
  %v387 = vsub.s32 %v384, %v386
  %v388 = vrot.slane %v341, %v387
  %v390 = vunpack.c.l.s4 1983009808
  %v391 = vunpack.c.0.s8 %v390
  %v392 = vlaneseq
  %v393 = vshrl.u32 %v392, 7
  %v394 = vsub.s32 %v391, %v393
  %v395 = vrot.slane %v381, %v394
  %v396 = vcombine.high %v388, %v388
  %v397 = vcombine.high %v395, %v395
  %v398 = vcombine.high %v342, %v342
  %v400 = vunpack.c.l.s4 1983009808
  %v401 = vunpack.c.0.s8 %v400
  %v402 = vlaneseq
  %v403 = vshrl.u32 %v402, 7
  %v404 = vsub.s32 %v401, %v403
  %v405 = vrot.slane %v342, %v404
  %v407 = vunpack.c.l.s4 1983009808
  %v408 = vunpack.c.0.s8 %v407
  %v409 = vlaneseq
  %v410 = vshrl.u32 %v409, 7
  %v411 = vsub.s32 %v408, %v410
  %v412 = vrot.slane %v398, %v411
  %v413 = vcombine.high %v405, %v405
  %vm429 = vcmask 123904
  %v430 = vsel %vm429, %v354, -inf
  %v431 = vrot.slane %v430, 4
  %v432 = vmax.f32 %v430, %v431
  %v433 = vrot.slane %v432, 2
  %v434 = vmax.f32 %v432, %v433
  %v435 = vrot.slane %v434, 1
  %v436 = vmax.f32 %v434, %v435
  %v437 = vsel %vm429, %v362, -inf
  %v438 = vrot.slane %v437, 4
  %v439 = vmax.f32 %v437, %v438
  %v440 = vrot.slane %v439, 2
  %v441 = vmax.f32 %v439, %v440
  %v442 = vrot.slane %v441, 1
  %v443 = vmax.f32 %v441, %v442
  %v444 = vsel %vm429, %v361, -inf
  %v445 = vrot.slane %v444, 4
  %v446 = vmax.f32 %v444, %v445
  %v447 = vrot.slane %v446, 2
  %v448 = vmax.f32 %v446, %v447
  %v449 = vrot.slane %v448, 1
  %v450 = vmax.f32 %v448, %v449
  %v451 = vsel %vm429, %v363, -inf
  %v452 = vrot.slane %v451, 4
  %v453 = vmax.f32 %v451, %v452
  %v454 = vrot.slane %v453, 2
  %v455 = vmax.f32 %v453, %v454
  %v456 = vrot.slane %v455, 1
  %v457 = vmax.f32 %v455, %v456
  %v458 = vsel %vm429, %v371, -inf
  %v459 = vrot.slane %v458, 4
  %v460 = vmax.f32 %v458, %v459
  %v461 = vrot.slane %v460, 2
  %v462 = vmax.f32 %v460, %v461
  %v463 = vrot.slane %v462, 1
  %v464 = vmax.f32 %v462, %v463
  %v465 = vsel %vm429, %v379, -inf
  %v466 = vrot.slane %v465, 4
  %v467 = vmax.f32 %v465, %v466
  %v468 = vrot.slane %v467, 2
  %v469 = vmax.f32 %v467, %v468
  %v470 = vrot.slane %v469, 1
  %v471 = vmax.f32 %v469, %v470
  %v472 = vsel %vm429, %v378, -inf
  %v473 = vrot.slane %v472, 4
  %v474 = vmax.f32 %v472, %v473
  %v475 = vrot.slane %v474, 2
  %v476 = vmax.f32 %v474, %v475
  %v477 = vrot.slane %v476, 1
  %v478 = vmax.f32 %v476, %v477
  %v479 = vsel %vm429, %v380, -inf
  %v480 = vrot.slane %v479, 4
  %v481 = vmax.f32 %v479, %v480
  %v482 = vrot.slane %v481, 2
  %v483 = vmax.f32 %v481, %v482
  %v484 = vrot.slane %v483, 1
  %v485 = vmax.f32 %v483, %v484
  %v486 = vsel %vm429, %v388, -inf
  %v487 = vrot.slane %v486, 4
  %v488 = vmax.f32 %v486, %v487
  %v489 = vrot.slane %v488, 2
  %v490 = vmax.f32 %v488, %v489
  %v491 = vrot.slane %v490, 1
  %v492 = vmax.f32 %v490, %v491
  %v493 = vsel %vm429, %v396, -inf
  %v494 = vrot.slane %v493, 4
  %v495 = vmax.f32 %v493, %v494
  %v496 = vrot.slane %v495, 2
  %v497 = vmax.f32 %v495, %v496
  %v498 = vrot.slane %v497, 1
  %v499 = vmax.f32 %v497, %v498
  %v500 = vsel %vm429, %v395, -inf
  %v501 = vrot.slane %v500, 4
  %v502 = vmax.f32 %v500, %v501
  %v503 = vrot.slane %v502, 2
  %v504 = vmax.f32 %v502, %v503
  %v505 = vrot.slane %v504, 1
  %v506 = vmax.f32 %v504, %v505
  %v507 = vsel %vm429, %v397, -inf
  %v508 = vrot.slane %v507, 4
  %v509 = vmax.f32 %v507, %v508
  %v510 = vrot.slane %v509, 2
  %v511 = vmax.f32 %v509, %v510
  %v512 = vrot.slane %v511, 1
  %v513 = vmax.f32 %v511, %v512
  %v514 = vsel %vm429, %v405, -inf
  %v515 = vrot.slane %v514, 4
  %v516 = vmax.f32 %v514, %v515
  %v517 = vrot.slane %v516, 2
  %v518 = vmax.f32 %v516, %v517
  %v519 = vrot.slane %v518, 1
  %v520 = vmax.f32 %v518, %v519
  %v521 = vsel %vm429, %v413, -inf
  %v522 = vrot.slane %v521, 4
  %v523 = vmax.f32 %v521, %v522
  %v524 = vrot.slane %v523, 2
  %v525 = vmax.f32 %v523, %v524
  %v526 = vrot.slane %v525, 1
  %v527 = vmax.f32 %v525, %v526
  %v528 = vsel %vm429, %v412, -inf
  %v529 = vrot.slane %v528, 4
  %v530 = vmax.f32 %v528, %v529
  %v531 = vrot.slane %v530, 2
  %v532 = vmax.f32 %v530, %v531
  %v533 = vrot.slane %v532, 1
  %v534 = vmax.f32 %v532, %v533
  %vm548 = vcmask 1041409
  %v549 = vsel %vm548, %v443, %v436
  %vm550 = vcmask 1042434
  %v551 = vsel %vm550, %v450, %v549
  %vm552 = vcmask 1043459
  %v553 = vsel %vm552, %v457, %v551
  %vm554 = vcmask 1044484
  %v555 = vsel %vm554, %v464, %v553
  %vm556 = vcmask 1045509
  %v557 = vsel %vm556, %v471, %v555
  %vm558 = vcmask 1046534
  %v559 = vsel %vm558, %v478, %v557
  %vm560 = vcmask 1047559
  %v561 = vsel %vm560, %v485, %v559
  %v562 = vsel %vm548, %v499, %v492
  %v563 = vsel %vm550, %v506, %v562
  %v564 = vsel %vm552, %v513, %v563
  %v565 = vsel %vm554, %v520, %v564
  %v569 = vsel %vm548, %v450, %v443
  %v570 = vsel %vm550, %v457, %v569
  %v571 = vsel %vm552, %v464, %v570
  %v572 = vsel %vm554, %v471, %v571
  %v573 = vsel %vm556, %v478, %v572
  %v574 = vsel %vm558, %v485, %v573
  %v575 = vsel %vm560, %v492, %v574
  %v576 = vsel %vm548, %v506, %v499
  %v577 = vsel %vm550, %v513, %v576
  %v578 = vsel %vm552, %v520, %v577
  %v579 = vsel %vm554, %v527, %v578
  %580 = vrot.lane.b32.xlu0 %v575, 16
  %v581 = vpop.permute.xlu0 %580
  %582 = vrot.lane.b32.xlu0 %v579, 16
  %v583 = vpop.permute.xlu0 %582
  %v587 = vsel %vm548, %v457, %v450
  %v588 = vsel %vm550, %v464, %v587
  %v589 = vsel %vm552, %v471, %v588
  %v590 = vsel %vm554, %v478, %v589
  %v591 = vsel %vm556, %v485, %v590
  %v592 = vsel %vm558, %v492, %v591
  %v593 = vsel %vm560, %v499, %v592
  %v594 = vsel %vm548, %v513, %v506
  %v595 = vsel %vm550, %v520, %v594
  %v596 = vsel %vm552, %v527, %v595
  %v597 = vsel %vm554, %v534, %v596
  %598 = vrot.lane.b32.xlu0 %v593, 32
  %v599 = vpop.permute.xlu0 %598
  %600 = vrot.lane.b32.xlu0 %v597, 32
  %v601 = vpop.permute.xlu0 %600
  %vm604 = vcmask 130048
  %v605 = vsel %vm604, %v561, %v581
  %v606 = vsel %vm604, %v565, %v583
  %v607 = vsel %vm227, %v605, %v599
  %v608 = vsel %vm227, %v606, %v601
  %v609 = vlaneseq
  %v610 = vshrl.u32 %v609, 7
  %v611 = vsub.s32 0, %v610
  %v612 = vrot.slane %v33, %v611
  %vm613 = vcmask 392192
  %v615 = vsel %vm613, %v607, 0
  %v618 = vsel %vm613, %v608, 0
  %620 = vmatprep.subr.mxu0 0.0
  %621 = vmatpush1.msra.mxu0 0.0
  %622 = vmatprep.subr.mxu0 0.0
  %623 = vmatpush1.msra.mxu0 0.0
  %624 = vmatprep.subr.mxu0 0.0
  %625 = vmatpush1.msra.mxu0 0.0
  %626 = vmatprep.subr.mxu0 0.0
  %627 = vmatpush1.msra.mxu0 0.0
  %628 = vmatprep.subr.mxu0 0.0
  %629 = vmatpush1.msra.mxu0 0.0
  %630 = vmatprep.subr.mxu0 0.0
  %631 = vmatpush1.msra.mxu0 0.0
  %632 = vmatprep.subr.mxu0 0.0
  %633 = vmatpush1.msra.mxu0 0.0
  %634 = vmatprep.subr.mxu0 0.0
  %635 = vmatpush1.msra.mxu0 0.0
  %636 = vmatprep.subr.mxu0 0.0
  %637 = vmatpush1.msra.mxu0 0.0
  %638 = vmatprep.subr.mxu0 0.0
  %639 = vmatpush1.msra.mxu0 0.0
  %640 = vmatprep.subr.mxu0 0.0
  %641 = vmatpush1.msra.mxu0 %v31
  %642 = vmatprep.subr.mxu0 0.0
  %643 = vmatpush1.msra.mxu0 %v30
  %644 = vmatprep.subr.mxu0 0.0
  %645 = vmatpush1.msra.mxu0 %v29
  %646 = vmatprep.subr.mxu0 0.0
  %647 = vmatpush1.msra.mxu0 %v28
  %648 = vmatprep.subr.mxu0 0.0
  %649 = vmatpush1.msra.mxu0 %v27
  %650 = vmatprep.subr.mxu0 0.0
  %651 = vmatpush1.msra.mxu0 %v26
  %652 = vmatprep.subr.mxu0 0.0
  %653 = vmatpush2.msra.mxu0 0.0
  %654 = vmatprep.subr.mxu0 0.0
  %655 = vmatpush2.msra.mxu0 0.0
  %656 = vmatprep.subr.mxu0 0.0
  %657 = vmatpush2.msra.mxu0 0.0
  %658 = vmatprep.subr.mxu0 0.0
  %659 = vmatpush2.msra.mxu0 0.0
  %660 = vmatprep.subr.mxu0 0.0
  %661 = vmatpush2.msra.mxu0 0.0
  %662 = vmatprep.subr.mxu0 0.0
  %663 = vmatpush2.msra.mxu0 0.0
  %664 = vmatprep.subr.mxu0 0.0
  %665 = vmatpush2.msra.mxu0 0.0
  %666 = vmatprep.subr.mxu0 0.0
  %667 = vmatpush2.msra.mxu0 0.0
  %668 = vmatprep.subr.mxu0 0.0
  %669 = vmatpush2.msra.mxu0 0.0
  %670 = vmatprep.subr.mxu0 0.0
  %671 = vmatpush2.msra.mxu0 0.0
  %672 = vmatprep.subr.mxu0 0.0
  %673 = vmatpush2.msra.mxu0 0.0
  %674 = vmatprep.subr.mxu0 0.0
  %675 = vmatpush2.msra.mxu0 0.0
  %676 = vmatprep.subr.mxu0 0.0
  %677 = vmatpush2.msra.mxu0 0.0
  %678 = vmatprep.subr.mxu0 0.0
  %679 = vmatpush2.msra.mxu0 0.0
  %680 = vmatprep.subr.mxu0 0.0
  %681 = vmatpush2.msra.mxu0 0.0
  %682 = vmatprep.subr.mxu0 0.0
  %683 = vmatpush2.msra.mxu0 0.0
  %684 = vmatprep.mubr.f32.mxu0 0.0
  %685 = vmatmul.mubr.f32.gmra.mxu0 %v615
  %v686 = vpop.f32.mrf.mxu0
  %v687 = vadd.f32 %v612, %v686
  %v688 = vpop.f32.mrf.mxu0
  %689 = vmatprep.mubr.f32.mxu0 0.0
  %690 = vmatmul.mubr.f32.gmra.mxu0 %v618
  %v691 = vpop.f32.mrf.mxu0
  %v692 = vadd.f32 %v612, %v691
  %v693 = vpop.f32.mrf.mxu0
  %694 = vdwg.mxu0
  %v695 = vmax.f32 %v687, 0.0
  %v696 = vmax.f32 %v692, 0.0
  %v700 = vunpack.c.l.s4 1983009808
  %v701 = vunpack.c.0.s8 %v700
  %v702 = vlaneseq
  %v703 = vshrl.u32 %v702, 7
  %v704 = vsub.s32 %v701, %v703
  %v705 = vrot.slane %v695, %v704
  %v706 = vcombine.high %v705, %v705
  %v708 = vunpack.c.l.s4 1983009808
  %v709 = vunpack.c.0.s8 %v708
  %v710 = vlaneseq
  %v711 = vshrl.u32 %v710, 7
  %v712 = vsub.s32 %v709, %v711
  %v713 = vrot.slane %v696, %v712
  %v714 = vcombine.high %v713, %v713
  %v719 = vsel %vm429, %v705, -inf
  %v720 = vrot.slane %v719, 4
  %v721 = vmax.f32 %v719, %v720
  %v722 = vrot.slane %v721, 2
  %v723 = vmax.f32 %v721, %v722
  %v724 = vrot.slane %v723, 1
  %v725 = vmax.f32 %v723, %v724
  %v726 = vsel %vm429, %v706, -inf
  %v727 = vrot.slane %v726, 4
  %v728 = vmax.f32 %v726, %v727
  %v729 = vrot.slane %v728, 2
  %v730 = vmax.f32 %v728, %v729
  %v731 = vrot.slane %v730, 1
  %v732 = vmax.f32 %v730, %v731
  %v733 = vsel %vm429, %v713, -inf
  %v734 = vrot.slane %v733, 4
  %v735 = vmax.f32 %v733, %v734
  %v736 = vrot.slane %v735, 2
  %v737 = vmax.f32 %v735, %v736
  %v738 = vrot.slane %v737, 1
  %v739 = vmax.f32 %v737, %v738
  %v740 = vsel %vm429, %v714, -inf
  %v741 = vrot.slane %v740, 4
  %v742 = vmax.f32 %v740, %v741
  %v743 = vrot.slane %v742, 2
  %v744 = vmax.f32 %v742, %v743
  %v745 = vrot.slane %v744, 1
  %v746 = vmax.f32 %v744, %v745
  %748 = vrot.lane.b32.xlu0 %v732, 16
  %v749 = vpop.permute.xlu0 %748
  %v751 = vsel %vm604, %v725, %v749
  %753 = vrot.lane.b32.xlu0 %v746, 16
  %v754 = vpop.permute.xlu0 %753
  %v756 = vsel %vm604, %v739, %v754
  %v758 = vrot.slane %v756, 7
  %vm760 = vcmask 1040384
  %v761 = vsel %vm760, %v751, %v758
  %v762 = vlaneseq
  %v763 = vshrl.u32 %v762, 7
  %v764 = vsub.s32 0, %v763
  %v765 = vrot.slane %v45, %v764
  %v767 = vsel %vm227, %v761, 0
  %769 = vmatprep.subr.mxu0 0.0
  %770 = vmatpush1.msra.mxu0 0.0
  %771 = vmatprep.subr.mxu0 0.0
  %772 = vmatpush1.msra.mxu0 0.0
  %773 = vmatprep.subr.mxu0 0.0
  %774 = vmatpush1.msra.mxu0 0.0
  %775 = vmatprep.subr.mxu0 0.0
  %776 = vmatpush1.msra.mxu0 0.0
  %777 = vmatprep.subr.mxu0 0.0
  %778 = vmatpush1.msra.mxu0 0.0
  %779 = vmatprep.subr.mxu0 0.0
  %780 = vmatpush1.msra.mxu0 0.0
  %781 = vmatprep.subr.mxu0 0.0
  %782 = vmatpush1.msra.mxu0 0.0
  %783 = vmatprep.subr.mxu0 0.0
  %784 = vmatpush1.msra.mxu0 0.0
  %785 = vmatprep.subr.mxu0 0.0
  %786 = vmatpush1.msra.mxu0 0.0
  %787 = vmatprep.subr.mxu0 0.0
  %788 = vmatpush1.msra.mxu0 0.0
  %789 = vmatprep.subr.mxu0 0.0
  %790 = vmatpush1.msra.mxu0 0.0
  %791 = vmatprep.subr.mxu0 0.0
  %792 = vmatpush1.msra.mxu0 0.0
  %793 = vmatprep.subr.mxu0 0.0
  %794 = vmatpush1.msra.mxu0 %v44
  %795 = vmatprep.subr.mxu0 0.0
  %796 = vmatpush1.msra.mxu0 %v43
  %797 = vmatprep.subr.mxu0 0.0
  %798 = vmatpush1.msra.mxu0 %v42
  %799 = vmatprep.subr.mxu0 0.0
  %800 = vmatpush1.msra.mxu0 %v41
  %801 = vmatprep.subr.mxu0 0.0
  %802 = vmatpush2.msra.mxu0 0.0
  %803 = vmatprep.subr.mxu0 0.0
  %804 = vmatpush2.msra.mxu0 0.0
  %805 = vmatprep.subr.mxu0 0.0
  %806 = vmatpush2.msra.mxu0 0.0
  %807 = vmatprep.subr.mxu0 0.0
  %808 = vmatpush2.msra.mxu0 0.0
  %809 = vmatprep.subr.mxu0 0.0
  %810 = vmatpush2.msra.mxu0 0.0
  %811 = vmatprep.subr.mxu0 0.0
  %812 = vmatpush2.msra.mxu0 0.0
  %813 = vmatprep.subr.mxu0 0.0
  %814 = vmatpush2.msra.mxu0 0.0
  %815 = vmatprep.subr.mxu0 0.0
  %816 = vmatpush2.msra.mxu0 0.0
  %817 = vmatprep.subr.mxu0 0.0
  %818 = vmatpush2.msra.mxu0 0.0
  %819 = vmatprep.subr.mxu0 0.0
  %820 = vmatpush2.msra.mxu0 0.0
  %821 = vmatprep.subr.mxu0 0.0
  %822 = vmatpush2.msra.mxu0 0.0
  %823 = vmatprep.subr.mxu0 0.0
  %824 = vmatpush2.msra.mxu0 0.0
  %825 = vmatprep.subr.mxu0 0.0
  %826 = vmatpush2.msra.mxu0 0.0
  %827 = vmatprep.subr.mxu0 0.0
  %828 = vmatpush2.msra.mxu0 0.0
  %829 = vmatprep.subr.mxu0 0.0
  %830 = vmatpush2.msra.mxu0 0.0
  %831 = vmatprep.subr.mxu0 0.0
  %832 = vmatpush2.msra.mxu0 0.0
  %833 = vmatprep.mubr.f32.mxu0 0.0
  %834 = vmatmul.mubr.f32.gmra.mxu0 %v767
  %v835 = vpop.f32.mrf.mxu0
  %v836 = vadd.f32 %v765, %v835
  %v837 = vpop.f32.mrf.mxu0
  %838 = vdwg.mxu0
  %v839 = vlaneseq
  %v840 = vshrl.u32 %v839, 7
  %v841 = vsub.s32 0, %v840
  %v842 = vrot.slane %v50, %v841
  %v844 = vsel %vm227, %v836, 0
  %846 = vmatprep.subr.mxu0 0.0
  %847 = vmatpush1.msra.mxu0 0.0
  %848 = vmatprep.subr.mxu0 0.0
  %849 = vmatpush1.msra.mxu0 0.0
  %850 = vmatprep.subr.mxu0 0.0
  %851 = vmatpush1.msra.mxu0 0.0
  %852 = vmatprep.subr.mxu0 0.0
  %853 = vmatpush1.msra.mxu0 0.0
  %854 = vmatprep.subr.mxu0 0.0
  %855 = vmatpush1.msra.mxu0 0.0
  %856 = vmatprep.subr.mxu0 0.0
  %857 = vmatpush1.msra.mxu0 0.0
  %858 = vmatprep.subr.mxu0 0.0
  %859 = vmatpush1.msra.mxu0 0.0
  %860 = vmatprep.subr.mxu0 0.0
  %861 = vmatpush1.msra.mxu0 0.0
  %862 = vmatprep.subr.mxu0 0.0
  %863 = vmatpush1.msra.mxu0 0.0
  %864 = vmatprep.subr.mxu0 0.0
  %865 = vmatpush1.msra.mxu0 0.0
  %866 = vmatprep.subr.mxu0 0.0
  %867 = vmatpush1.msra.mxu0 0.0
  %868 = vmatprep.subr.mxu0 0.0
  %869 = vmatpush1.msra.mxu0 0.0
  %870 = vmatprep.subr.mxu0 0.0
  %871 = vmatpush1.msra.mxu0 %v49
  %872 = vmatprep.subr.mxu0 0.0
  %873 = vmatpush1.msra.mxu0 %v48
  %874 = vmatprep.subr.mxu0 0.0
  %875 = vmatpush1.msra.mxu0 %v47
  %876 = vmatprep.subr.mxu0 0.0
  %877 = vmatpush1.msra.mxu0 %v46
  %878 = vmatprep.subr.mxu0 0.0
  %879 = vmatpush2.msra.mxu0 0.0
  %880 = vmatprep.subr.mxu0 0.0
  %881 = vmatpush2.msra.mxu0 0.0
  %882 = vmatprep.subr.mxu0 0.0
  %883 = vmatpush2.msra.mxu0 0.0
  %884 = vmatprep.subr.mxu0 0.0
  %885 = vmatpush2.msra.mxu0 0.0
  %886 = vmatprep.subr.mxu0 0.0
  %887 = vmatpush2.msra.mxu0 0.0
  %888 = vmatprep.subr.mxu0 0.0
  %889 = vmatpush2.msra.mxu0 0.0
  %890 = vmatprep.subr.mxu0 0.0
  %891 = vmatpush2.msra.mxu0 0.0
  %892 = vmatprep.subr.mxu0 0.0
  %893 = vmatpush2.msra.mxu0 0.0
  %894 = vmatprep.subr.mxu0 0.0
  %895 = vmatpush2.msra.mxu0 0.0
  %896 = vmatprep.subr.mxu0 0.0
  %897 = vmatpush2.msra.mxu0 0.0
  %898 = vmatprep.subr.mxu0 0.0
  %899 = vmatpush2.msra.mxu0 0.0
  %900 = vmatprep.subr.mxu0 0.0
  %901 = vmatpush2.msra.mxu0 0.0
  %902 = vmatprep.subr.mxu0 0.0
  %903 = vmatpush2.msra.mxu0 0.0
  %904 = vmatprep.subr.mxu0 0.0
  %905 = vmatpush2.msra.mxu0 0.0
  %906 = vmatprep.subr.mxu0 0.0
  %907 = vmatpush2.msra.mxu0 0.0
  %908 = vmatprep.subr.mxu0 0.0
  %909 = vmatpush2.msra.mxu0 0.0
  %910 = vmatprep.mubr.f32.mxu0 0.0
  %911 = vmatmul.mubr.f32.gmra.mxu0 %v844
  %v912 = vpop.f32.mrf.mxu0
  %v913 = vadd.f32 %v842, %v912
  %v914 = vpop.f32.mrf.mxu0
  %915 = vdwg.mxu0
  %vm916 = vcmask 1024
  %917 = vst.msk [vmem:[%s3] sm:$0x3] %vm916, %v913
  // Predicated region
  $region14: #{cnn_text_forward.1} parent=0 // pred_check
    _
  $region15: #{cnn_text_forward.1} parent=0 // pred_check_branch
    %919 = sbr.rel (0) target = $region17
  $region16: #{cnn_text_forward.1} parent=0 // pred_region
    _
  $region17: #{cnn_text_forward.1} parent=0 // pred_fallthru
    _
  // Predicated region
  $region18: #{cnn_text_forward.1} parent=0 // pred_check
    _
  $region19: #{cnn_text_forward.1} parent=0 // pred_check_branch
    %921 = sbr.rel (0) target = $region21
  $region20: #{cnn_text_forward.1} parent=0 // pred_region
    _
  $region21: #{cnn_text_forward.1} parent=0 // pred_fallthru
    _

</llo_original>
